<compile_context>
chip_gen: v7x
topology: tpu7x:2x2x1
jax: 0.10.0
libtpu: 0.0.40
codegen_flags: <defaults>
</compile_context>

<pallas_src>
import math
from functools import partial

import jax
import jax.numpy as jnp
from jax.experimental import pallas as pl
from jax.experimental.pallas import tpu as pltpu


def _round_up(n, m):
    return ((n + m - 1) // m) * m


def _largest_divisor_tile(total, unit, cap):
    t = min(cap, total)
    while total % t:
        t -= unit
    return t


# ---------------------------------------------------------------------------
# Kernel 1: fused QKV projection, emitted directly in the attention layout.
#   x_ref  [tn, D]     bf16
#   wt_ref [3*HC, D]   bf16   (transposed fused weight; 1/sqrt(C) folded into Q)
#   b_ref  [3*HC, 1]   f32
#   q/k/v  [HC, tn]    bf16   (nodes on the lane axis -> lane-dense stores)
# ---------------------------------------------------------------------------
def _qkv_proj_kernel(x_ref, wt_ref, b_ref, q_ref, k_ref, v_ref, *, hc):
    y = jax.lax.dot_general(
        wt_ref[...], x_ref[...],
        dimension_numbers=(((1,), (1,)), ((), ())),
        preferred_element_type=jnp.float32)                 # [3HC, tn]
    y = (y + b_ref[...]).astype(jnp.bfloat16)
    q_ref[...] = y[0 * hc:1 * hc, :]
    k_ref[...] = y[1 * hc:2 * hc, :]
    v_ref[...] = y[2 * hc:3 * hc, :]


# ---------------------------------------------------------------------------
# Kernel 2: flash-style masked neighbor-softmax attention.
#   cnt_ref [ntm]       int32 SMEM  (# src tiles with edges for each dst tile)
#   tbl_ref [ntm, ntk]  int32 SMEM  (those src-tile ids, edge tiles first)
#   q_ref   [HC, tm]  bf16 ; k_ref/v_ref [HC, tk] bf16 ; adj_ref [tm, tk] int8
#   gamma/beta [1, HC] f32 ; o_ref [tm, HC] f32
#   scratch: m_sc/l_sc [H, tm, 1] f32, acc_sc [H, tm, C] f32
# ---------------------------------------------------------------------------
def _attn_kernel(cnt_ref, tbl_ref,
                 q_ref, k_ref, v_ref, adj_ref, gamma_ref, beta_ref,
                 o_ref, m_sc, l_sc, acc_sc, *, num_heads, head_dim):
    H, C = num_heads, head_dim
    i = pl.program_id(0)
    ki = pl.program_id(1)

    @pl.when(ki == 0)
    def _init():
        m_sc[...] = jnp.full_like(m_sc, -jnp.inf)
        l_sc[...] = jnp.zeros_like(l_sc)
        acc_sc[...] = jnp.zeros_like(acc_sc)

    # Only src tiles that actually contain edges for this dst tile are visited;
    # steps beyond the per-row edge-tile count do no DMA (clamped index map)
    # and no compute.
    @pl.when(ki < cnt_ref[i])
    def _compute():
        # Additive mask applied BEFORE the running max: non-edges -> -1e30, so
        # the max tracks edge-only scores (no exp underflow hazard) and no
        # separate multiplicative-mask pass is needed.
        bias = (adj_ref[...].astype(jnp.float32) - 1.0) * 1e30      # [tm, tk]
        for h in range(H):                                          # static
            q_h = q_ref[h * C:(h + 1) * C, :]                       # [C, tm]
            k_h = k_ref[h * C:(h + 1) * C, :]                       # [C, tk]
            v_h = v_ref[h * C:(h + 1) * C, :]                       # [C, tk]
            s = jax.lax.dot_general(
                q_h, k_h, dimension_numbers=(((0,), (0,)), ((), ())),
                preferred_element_type=jnp.float32)                 # [tm, tk]
            s = s + bias
            m_prev = m_sc[h]                                        # [tm, 1]
            m_new = jnp.maximum(m_prev, jnp.max(s, axis=-1, keepdims=True))
            alpha = jnp.exp(m_prev - m_new)
            p = jnp.exp(s - m_new)                                  # [tm, tk]
            l_sc[h] = alpha * l_sc[h] + jnp.sum(p, axis=-1, keepdims=True)
            pv = jax.lax.dot_general(
                p.astype(jnp.bfloat16), v_h,
                dimension_numbers=(((1,), (1,)), ((), ())),
                preferred_element_type=jnp.float32)                 # [tm, C]
            acc_sc[h] = alpha * acc_sc[h] + pv
            m_sc[h] = m_new

    @pl.when(ki == pl.num_programs(1) - 1)
    def _finalize():
        for h in range(H):
            # nodes with no neighbours (incl. padding rows) keep m ~ -1e30/-inf
            valid = m_sc[h] > -1e20
            inv = jnp.where(valid, pl.reciprocal(l_sc[h], approx=True), 0.0)
            g = gamma_ref[:, h * C:(h + 1) * C]                     # [1, C]
            b = beta_ref[:, h * C:(h + 1) * C]                      # [1, C]
            o_ref[:, h * C:(h + 1) * C] = (acc_sc[h] * inv) * g + b


# ---------------------------------------------------------------------------
# Wrapper
# ---------------------------------------------------------------------------
def transformer_conv_with_bn_reparam(x, edge_index, params, *, num_heads, head_dim):
    """x: [N, embed_dim] f32; edge_index: [2, E] int32 (row 0 = src, row 1 = dst)."""
    N, D = x.shape
    H, C = num_heads, head_dim
    HC = H * C
    scale = 1.0 / math.sqrt(C)

    # ---- node padding & attention tile sizes (re-derived per graph size) ----
    if N <= 256:
        Np = _round_up(N, 128)
        tm = Np
    elif N <= 1024:
        Np = _round_up(N, 256)
        tm = Np // 2                      # >= 2 dst tiles -> both TCs busy
    else:
        Np = _round_up(N, 512)
        tm = 512
    tk = _largest_divisor_tile(Np, 128, 4096)
    ntm, ntk = Np // tm, Np // tk

    xp = x if Np == N else jnp.pad(x, ((0, Np - N), (0, 0)))

    # dense adjacency mask in int8 (smallest dense-mask HBM/DMA stream):
    #   adj[i, j] = 1 iff edge j -> i
    # TODO(synk): adjacency is still O(N^2) in HBM; a fully per-edge sparse
    # (gather/scatter) formulation would be needed for very large graphs.
    src, dst = edge_index[0], edge_index[1]
    adj = jnp.zeros((Np, Np), jnp.int8).at[dst, src].set(1)

    # per-dst-tile table of src tiles that contain at least one edge
    dst_tile = (dst // tm).astype(jnp.int32)
    src_tile = (src // tk).astype(jnp.int32)
    presence = jnp.zeros((ntm, ntk), jnp.int32).at[dst_tile, src_tile].set(1)
    counts = presence.sum(axis=1).astype(jnp.int32)                  # [ntm]
    table = jnp.argsort(1 - presence, axis=1).astype(jnp.int32)      # [ntm, ntk]

    # ---- kernel 1: fused QKV projection (1/sqrt(C) folded into Q) ----------
    w_qkv_t = jnp.concatenate(
        [params["wq"] * scale, params["wk"], params["wv"]], axis=1).T  # [3HC, D]
    b_qkv = jnp.concatenate(
        [params["bq"] * scale, params["bk"], params["bv"]]).reshape(3 * HC, 1)

    tn = tk                                   # large row tile; divides Np
    qh, kh, vh = pl.pallas_call(
        partial(_qkv_proj_kernel, hc=HC),
        out_shape=(jax.ShapeDtypeStruct((HC, Np), jnp.bfloat16),) * 3,
        grid_spec=pltpu.PrefetchScalarGridSpec(
            num_scalar_prefetch=0,
            grid=(Np // tn,),
            in_specs=[pl.BlockSpec((tn, D), lambda n: (n, 0)),
                      pl.BlockSpec((3 * HC, D), lambda n: (0, 0)),
                      pl.BlockSpec((3 * HC, 1), lambda n: (0, 0))],
            out_specs=(pl.BlockSpec((HC, tn), lambda n: (0, n)),
                       pl.BlockSpec((HC, tn), lambda n: (0, n)),
                       pl.BlockSpec((HC, tn), lambda n: (0, n)))),
        compiler_params=pltpu.CompilerParams(
            dimension_semantics=("parallel",)),
    )(xp.astype(jnp.bfloat16), w_qkv_t.astype(jnp.bfloat16),
      b_qkv.astype(jnp.float32))

    # TODO(synk): gamma/beta of shape (embed_dim,) only match the (N, H*C)
    # output because the module uses embed_dim == num_heads * head_dim.
    gamma = params["gamma"].reshape(1, HC).astype(jnp.float32)
    beta = params["beta"].reshape(1, HC).astype(jnp.float32)

    # scoped-VMEM budget derived from the actual tiles (valid on v5e/v6e/v7x)
    adj_b = tm * tk                        # int8
    kv_b = HC * tk * 2                     # bf16
    q_b = HC * tm * 2
    out_b = tm * HC * 4
    scr_b = 3 * H * tm * 128 * 4           # lane-padded scratch, conservative
    vmem_bytes = 2 * (adj_b + 2 * kv_b + q_b + out_b) + scr_b + (4 << 20)
    vmem_bytes = int(min(max(vmem_bytes, 16 << 20), 32 << 20))

    def _kv_idx(i, kk, cnt, tbl):
        j = jnp.minimum(kk, jnp.maximum(cnt[i] - 1, 0))
        return (0, tbl[i, j])

    def _adj_idx(i, kk, cnt, tbl):
        j = jnp.minimum(kk, jnp.maximum(cnt[i] - 1, 0))
        return (i, tbl[i, j])

    out = pl.pallas_call(
        partial(_attn_kernel, num_heads=H, head_dim=C),
        out_shape=jax.ShapeDtypeStruct((Np, HC), jnp.float32),
        grid_spec=pltpu.PrefetchScalarGridSpec(
            num_scalar_prefetch=2,
            grid=(ntm, ntk),
            in_specs=[
                pl.BlockSpec((HC, tm), lambda i, kk, cnt, tbl: (0, i)),   # Q
                pl.BlockSpec((HC, tk), _kv_idx),                          # K
                pl.BlockSpec((HC, tk), _kv_idx),                          # V
                pl.BlockSpec((tm, tk), _adj_idx),                         # adj
                pl.BlockSpec((1, HC), lambda i, kk, cnt, tbl: (0, 0)),    # gamma
                pl.BlockSpec((1, HC), lambda i, kk, cnt, tbl: (0, 0)),    # beta
            ],
            out_specs=pl.BlockSpec((tm, HC), lambda i, kk, cnt, tbl: (i, 0)),
            scratch_shapes=[pltpu.VMEM((H, tm, 1), jnp.float32),   # running max
                            pltpu.VMEM((H, tm, 1), jnp.float32),   # running denom
                            pltpu.VMEM((H, tm, C), jnp.float32)]), # accumulator
        compiler_params=pltpu.CompilerParams(
            dimension_semantics=("parallel", "arbitrary"),
            vmem_limit_bytes=vmem_bytes),
    )(counts, table, qh, kh, vh, adj, gamma, beta)

    return out[:N]


# ---------------------------------------------------------------------------
# Pure-JAX f32 reference of the same math (dense masked neighbor softmax)
# ---------------------------------------------------------------------------
def _reference(x, edge_index, params, *, num_heads, head_dim):
    N, _ = x.shape
    src, dst = edge_index[0], edge_index[1]
    adj = jnp.zeros((N, N), jnp.float32).at[dst, src].set(1.0)
    q = x @ params["wq"] + params["bq"]
    k = x @ params["wk"] + params["bk"]
    v = x @ params["wv"] + params["bv"]
    qh = q.reshape(N, num_heads, head_dim)
    kh = k.reshape(N, num_heads, head_dim)
    vh = v.reshape(N, num_heads, head_dim)
    s = jnp.einsum("ihc,jhc->hij", qh, kh) / math.sqrt(head_dim)
    s = jnp.where(adj[None] > 0, s, -1e30)
    p = jnp.exp(s - jnp.max(s, axis=-1, keepdims=True)) * adj[None]
    denom = jnp.sum(p, axis=-1, keepdims=True)
    o = jnp.einsum("hij,jhc->ihc", p / jnp.where(denom > 0, denom, 1.0), vh)
    h = o.reshape(N, num_heads * head_dim)
    return params["gamma"] * h + params["beta"]


if __name__ == "__main__":
    embed_dim, head_dim, num_heads = 32, 8, 4      # embed_dim == head_dim*num_heads
    N = 16
    HC = num_heads * head_dim

    key = jax.random.PRNGKey(0)
    kx, kq, kk_, kv_, kbq, kbk, kbv = jax.random.split(key, 7)

    x = jax.random.normal(kx, (N, embed_dim), jnp.float32)

    glorot = math.sqrt(6.0 / (embed_dim + HC))
    params = {
        "wq": jax.random.uniform(kq, (embed_dim, HC), jnp.float32, -glorot, glorot),
        "wk": jax.random.uniform(kk_, (embed_dim, HC), jnp.float32, -glorot, glorot),
        "wv": jax.random.uniform(kv_, (embed_dim, HC), jnp.float32, -glorot, glorot),
        "bq": 0.01 * jax.random.normal(kbq, (HC,), jnp.float32),
        "bk": 0.01 * jax.random.normal(kbk, (HC,), jnp.float32),
        "bv": 0.01 * jax.random.normal(kbv, (HC,), jnp.float32),
        "gamma": jnp.ones((embed_dim,), jnp.float32),   # per module __init__
        "beta": jnp.zeros((embed_dim,), jnp.float32),
    }

    # deterministic small graph: a ring plus a few chords; edge_index[0]=src, [1]=dst
    src = jnp.array(list(range(N)) + [0, 2, 5, 7, 11, 13], dtype=jnp.int32)
    dst = jnp.array([(i + 1) % N for i in range(N)] + [8, 9, 1, 3, 4, 6],
                    dtype=jnp.int32)
    edge_index = jnp.stack([src, dst], axis=0)

    out = transformer_conv_with_bn_reparam(
        x, edge_index, params, num_heads=num_heads, head_dim=head_dim)
    out = jax.block_until_ready(out)

    ref = _reference(x, edge_index, params, num_heads=num_heads, head_dim=head_dim)
    assert out.shape == (N, HC)
    # bf16 MXU operands (f32 accumulation) vs a pure-f32 reference -> loose tol
    assert jnp.allclose(out, ref, atol=3e-2, rtol=3e-2), "mismatch vs reference"

    print("KERNEL_OK")
</pallas_src>

<mosaic_0001>
module attributes {stable_mosaic.version = 11 : i64} {
  func.func @_qkv_proj_kernel(%arg0: i32, %arg1: memref<128x32xbf16, #tpu.memory_space<vmem>>, %arg2: memref<96x32xbf16, #tpu.memory_space<vmem>>, %arg3: memref<96x1xf32, #tpu.memory_space<vmem>>, %arg4: memref<32x128xbf16, #tpu.memory_space<vmem>>, %arg5: memref<32x128xbf16, #tpu.memory_space<vmem>>, %arg6: memref<32x128xbf16, #tpu.memory_space<vmem>>) attributes {dimension_semantics = [#tpu.dimension_semantics<parallel>], iteration_bounds = array<i64: 1>, scalar_prefetch = 0 : i64, scratch_operands = 0 : i64, tpu.core_type = #tpu.core_type<tc>, window_params = [{transform_indices = @transform_0, window_bounds = array<i64: 128, 32>}, {pipeline_mode = #tpu.pipeline_mode<synchronous>, transform_indices = @transform_1, window_bounds = array<i64: 96, 32>}, {pipeline_mode = #tpu.pipeline_mode<synchronous>, transform_indices = @transform_2, window_bounds = array<i64: 96, 1>}, {transform_indices = @transform_3, window_bounds = array<i64: 32, 128>}, {transform_indices = @transform_4, window_bounds = array<i64: 32, 128>}, {transform_indices = @transform_5, window_bounds = array<i64: 32, 128>}]} {
    %c0 = arith.constant 0 : index
    %c0_0 = arith.constant 0 : index
    %0 = vector.load %arg2[%c0, %c0_0] : memref<96x32xbf16, #tpu.memory_space<vmem>>, vector<96x32xbf16>
    %c0_1 = arith.constant 0 : index
    %c0_2 = arith.constant 0 : index
    %1 = vector.load %arg1[%c0_1, %c0_2] : memref<128x32xbf16, #tpu.memory_space<vmem>>, vector<128x32xbf16>
    %cst = arith.constant dense<0.000000e+00> : vector<96x128xf32>
    %2 = tpu.matmul %0, %1, %cst {dimension_numbers = #tpu.dot_dimension_numbers<[1], [1], [0], [0], [0, 0, 1, 0], [], []>} : vector<96x32xbf16>, vector<128x32xbf16>, vector<96x128xf32> -> vector<96x128xf32>
    %c0_3 = arith.constant 0 : index
    %c0_4 = arith.constant 0 : index
    %3 = vector.load %arg3[%c0_3, %c0_4] : memref<96x1xf32, #tpu.memory_space<vmem>>, vector<96x1xf32>
    %4 = vector.broadcast %3 : vector<96x1xf32> to vector<96x128xf32>
    %5 = arith.addf %2, %4 : vector<96x128xf32>
    %6 = arith.truncf %5 : vector<96x128xf32> to vector<96x128xbf16>
    %7 = vector.extract_strided_slice %6 {offsets = [0, 0], sizes = [32, 128], strides = [1, 1]} : vector<96x128xbf16> to vector<32x128xbf16>
    %c0_5 = arith.constant 0 : index
    %c0_6 = arith.constant 0 : index
    %8 = vector.load %arg4[%c0_5, %c0_6] : memref<32x128xbf16, #tpu.memory_space<vmem>>, vector<32x128xbf16>
    tpu.vector_store %arg4[%c0_5, %c0_6], %7 {strides = array<i32>} : memref<32x128xbf16, #tpu.memory_space<vmem>>, vector<32x128xbf16>,
    %9 = vector.extract_strided_slice %6 {offsets = [32, 0], sizes = [32, 128], strides = [1, 1]} : vector<96x128xbf16> to vector<32x128xbf16>
    %c0_7 = arith.constant 0 : index
    %c0_8 = arith.constant 0 : index
    %10 = vector.load %arg5[%c0_7, %c0_8] : memref<32x128xbf16, #tpu.memory_space<vmem>>, vector<32x128xbf16>
    tpu.vector_store %arg5[%c0_7, %c0_8], %9 {strides = array<i32>} : memref<32x128xbf16, #tpu.memory_space<vmem>>, vector<32x128xbf16>,
    %11 = vector.extract_strided_slice %6 {offsets = [64, 0], sizes = [32, 128], strides = [1, 1]} : vector<96x128xbf16> to vector<32x128xbf16>
    %c0_9 = arith.constant 0 : index
    %c0_10 = arith.constant 0 : index
    %12 = vector.load %arg6[%c0_9, %c0_10] : memref<32x128xbf16, #tpu.memory_space<vmem>>, vector<32x128xbf16>
    tpu.vector_store %arg6[%c0_9, %c0_10], %11 {strides = array<i32>} : memref<32x128xbf16, #tpu.memory_space<vmem>>, vector<32x128xbf16>,
    return
  }
  func.func @transform_0(%arg0: i32) -> (i32, i32) {
    %c0_i32 = arith.constant 0 : i32
    %c0_i32_0 = arith.constant 0 : i32
    return %arg0, %c0_i32 : i32, i32
  }
  func.func @transform_1(%arg0: i32) -> (i32, i32) {
    %c0_i32 = arith.constant 0 : i32
    %c0_i32_0 = arith.constant 0 : i32
    %c0_i32_1 = arith.constant 0 : i32
    return %c0_i32, %c0_i32_0 : i32, i32
  }
  func.func @transform_2(%arg0: i32) -> (i32, i32) {
    %c0_i32 = arith.constant 0 : i32
    %c0_i32_0 = arith.constant 0 : i32
    %c0_i32_1 = arith.constant 0 : i32
    return %c0_i32, %c0_i32_0 : i32, i32
  }
  func.func @transform_3(%arg0: i32) -> (i32, i32) {
    %c0_i32 = arith.constant 0 : i32
    %c0_i32_0 = arith.constant 0 : i32
    return %c0_i32, %arg0 : i32, i32
  }
  func.func @transform_4(%arg0: i32) -> (i32, i32) {
    %c0_i32 = arith.constant 0 : i32
    %c0_i32_0 = arith.constant 0 : i32
    return %c0_i32, %arg0 : i32, i32
  }
  func.func @transform_5(%arg0: i32) -> (i32, i32) {
    %c0_i32 = arith.constant 0 : i32
    %c0_i32_0 = arith.constant 0 : i32
    return %c0_i32, %arg0 : i32, i32
  }
}

</mosaic_0001>

<llo_original>
// kernel: tpu_custom_call.1
$region0: #{tpu_custom_call.1}
  #allocation0 [shape = 'u32[]', space=smem, size = 0x4, offset = 0x4, fixed_abs, tag = 'smem constant byte address 0x4 - core index']
  #allocation1 [shape = 'u32[144,128]{1,0:T(1,128)}', space=vmem, size = 0x12000, scoped, tag = 'internal scratch']
  %s0 = inlined_call_operand.vmem [shape: bf16[128,32], index: 0, kind: input, shape index: {}]
  %s1 = inlined_call_operand.vmem [shape: bf16[96,32], index: 1, kind: input, shape index: {}]
  %s2 = inlined_call_operand.vmem [shape: f32[96,1], index: 2, kind: input, shape index: {}]
  %s3 = inlined_call_operand.hbm [shape: bf16[32,128], index: 3, kind: output, shape index: {0}]
  %s4 = inlined_call_operand.hbm [shape: bf16[32,128], index: 4, kind: output, shape index: {1}]
  %s5 = inlined_call_operand.hbm [shape: bf16[32,128], index: 5, kind: output, shape index: {2}]
  %6 = xla_tuple %s3, %s4, %s5
  %s7 = sld [smem:[#allocation0]]
  $region38: #{tpu_custom_call.1} parent=0
    _
  %s9 = ssub.s32 1, %s7
  %s10 = scalar_select 0, %s9, %s7
  $region1: #{tpu_custom_call.1} parent=0
    #allocation2 [shape = 'u8[8192]{0}', space=vmem, size = 0x2000, scoped, tag = 'output window, operand 0, single buffered']
    #allocation3 [shape = 's32[1]{0}', space=sflag, size = 0x4, scoped, tag = 'scoped memory for tpu_custom_call.1']
    #allocation4 [shape = 'u8[8192]{0}', space=vmem, size = 0x2000, scoped, tag = 'output window, operand 1, single buffered']
    #allocation5 [shape = 's32[1]{0}', space=sflag, size = 0x4, scoped, tag = 'scoped memory for tpu_custom_call.1']
    #allocation6 [shape = 'u8[8192]{0}', space=vmem, size = 0x2000, scoped, tag = 'output window, operand 2, single buffered']
    %11 = vsyncpa [#allocation3], 0
    %12 = vsyncpa [#allocation5], 0
    // Predicated region
    $region2: #{tpu_custom_call.1} parent=1 // pred_check
      _
    $region3: #{tpu_custom_call.1} parent=1 // pred_check_branch
      %14 = sbr.rel (0) target = $region5
    $region4: #{tpu_custom_call.1} parent=1 // pred_region
      _
    $region5: #{tpu_custom_call.1} parent=1 // pred_fallthru
      _
    // Predicated region
    $region6: #{tpu_custom_call.1} parent=1 // pred_check
      _
    $region7: #{tpu_custom_call.1} parent=1 // pred_check_branch
      %16 = sbr.rel (0) target = $region9
    $region8: #{tpu_custom_call.1} parent=1 // pred_region
      _
    $region9: #{tpu_custom_call.1} parent=1 // pred_fallthru
      _
    // Predicated region
    $region10: #{tpu_custom_call.1} parent=1 // pred_check
      _
    $region11: #{tpu_custom_call.1} parent=1 // pred_check_branch
      %18 = sbr.rel (0) target = $region13
    $region12: #{tpu_custom_call.1} parent=1 // pred_region
      _
    $region13: #{tpu_custom_call.1} parent=1 // pred_fallthru
      _
    %v20 = vld [vmem:[%s1] sm:$0xf]
    %v21 = vld [vmem:[%s1 + $0x4] sm:$0xf]
    %v22 = vld [vmem:[%s1 + $0x8] sm:$0xf]
    %v23 = vld [vmem:[%s1 + $0xc] sm:$0xf]
    %v24 = vld [vmem:[%s1 + $0x10] sm:$0xf]
    %v25 = vld [vmem:[%s1 + $0x14] sm:$0xf]
    %v26 = vld [vmem:[%s1 + $0x18] sm:$0xf]
    %v27 = vld [vmem:[%s1 + $0x1c] sm:$0xf]
    %v28 = vld [vmem:[%s1 + $0x20] sm:$0xf]
    %v29 = vld [vmem:[%s1 + $0x24] sm:$0xf]
    %v30 = vld [vmem:[%s1 + $0x28] sm:$0xf]
    %v31 = vld [vmem:[%s1 + $0x2c] sm:$0xf]
    %v32 = vld [vmem:[%s0] sm:$0xf]
    %v33 = vld [vmem:[%s0 + $0x4] sm:$0xf]
    %v34 = vld [vmem:[%s0 + $0x8] sm:$0xf]
    %v35 = vld [vmem:[%s0 + $0xc] sm:$0xf]
    %v36 = vld [vmem:[%s0 + $0x10] sm:$0xf]
    %v37 = vld [vmem:[%s0 + $0x14] sm:$0xf]
    %v38 = vld [vmem:[%s0 + $0x18] sm:$0xf]
    %v39 = vld [vmem:[%s0 + $0x1c] sm:$0xf]
    %v40 = vld [vmem:[%s0 + $0x20] sm:$0xf]
    %v41 = vld [vmem:[%s0 + $0x24] sm:$0xf]
    %v42 = vld [vmem:[%s0 + $0x28] sm:$0xf]
    %v43 = vld [vmem:[%s0 + $0x2c] sm:$0xf]
    %v44 = vld [vmem:[%s0 + $0x30] sm:$0xf]
    %v45 = vld [vmem:[%s0 + $0x34] sm:$0xf]
    %v46 = vld [vmem:[%s0 + $0x38] sm:$0xf]
    %v47 = vld [vmem:[%s0 + $0x3c] sm:$0xf]
    %v48 = vld [vmem:[%s2] sm:$0xff]
    %v49 = vld [vmem:[%s2 + $0x8] sm:$0xff]
    %v50 = vld [vmem:[%s2 + $0x10] sm:$0xff]
    %v51 = vld [vmem:[%s2 + $0x18] sm:$0xff]
    %v52 = vld [vmem:[%s2 + $0x20] sm:$0xff]
    %v53 = vld [vmem:[%s2 + $0x28] sm:$0xff]
    %v54 = vld [vmem:[%s2 + $0x30] sm:$0xff]
    %v55 = vld [vmem:[%s2 + $0x38] sm:$0xff]
    %v56 = vld [vmem:[%s2 + $0x40] sm:$0xff]
    %v57 = vld [vmem:[%s2 + $0x48] sm:$0xff]
    %v58 = vld [vmem:[%s2 + $0x50] sm:$0xff]
    %v59 = vld [vmem:[%s2 + $0x58] sm:$0xff]
    %61 = vset.pattern.permute.xlu0 0
    %62 = vperm.xlu0 %61, %v48
    %v63 = vpop.permute.xlu0 %62
    %66 = vset.pattern.permute.xlu0 0
    %67 = vperm.xlu0 %66, %v49
    %v68 = vpop.permute.xlu0 %67
    %71 = vset.pattern.permute.xlu0 0
    %72 = vperm.xlu0 %71, %v50
    %v73 = vpop.permute.xlu0 %72
    %76 = vset.pattern.permute.xlu0 0
    %77 = vperm.xlu0 %76, %v51
    %v78 = vpop.permute.xlu0 %77
    %81 = vset.pattern.permute.xlu0 0
    %82 = vperm.xlu0 %81, %v52
    %v83 = vpop.permute.xlu0 %82
    %86 = vset.pattern.permute.xlu0 0
    %87 = vperm.xlu0 %86, %v53
    %v88 = vpop.permute.xlu0 %87
    %91 = vset.pattern.permute.xlu0 0
    %92 = vperm.xlu0 %91, %v54
    %v93 = vpop.permute.xlu0 %92
    %96 = vset.pattern.permute.xlu0 0
    %97 = vperm.xlu0 %96, %v55
    %v98 = vpop.permute.xlu0 %97
    %101 = vset.pattern.permute.xlu0 0
    %102 = vperm.xlu0 %101, %v56
    %v103 = vpop.permute.xlu0 %102
    %106 = vset.pattern.permute.xlu0 0
    %107 = vperm.xlu0 %106, %v57
    %v108 = vpop.permute.xlu0 %107
    %111 = vset.pattern.permute.xlu0 0
    %112 = vperm.xlu0 %111, %v58
    %v113 = vpop.permute.xlu0 %112
    %116 = vset.pattern.permute.xlu0 0
    %117 = vperm.xlu0 %116, %v59
    %v118 = vpop.permute.xlu0 %117
    %v132 = vunpack.c.l.b16 %v20
    %v133 = vunpack.c.l.b16 %v21
    %v134 = vunpack.c.l.b16 %v22
    %v135 = vunpack.c.l.b16 %v23
    %v136 = vunpack.c.l.b16 %v24
    %v137 = vunpack.c.l.b16 %v25
    %v138 = vunpack.c.l.b16 %v26
    %v139 = vunpack.c.l.b16 %v27
    %v140 = vunpack.c.l.b16 %v28
    %v141 = vunpack.c.l.b16 %v29
    %v142 = vunpack.c.l.b16 %v30
    %v143 = vunpack.c.l.b16 %v31
    %v144 = vpack.c.b16 %v133, %v132
    %v145 = vpack.c.b16 %v135, %v134
    %v146 = vpack.c.b16 %v137, %v136
    %v147 = vpack.c.b16 %v139, %v138
    %v148 = vpack.c.b16 %v141, %v140
    %v149 = vpack.c.b16 %v143, %v142
    %v166 = vunpack.c.l.b16 %v32
    %v167 = vunpack.c.l.b16 %v33
    %v168 = vunpack.c.l.b16 %v34
    %v169 = vunpack.c.l.b16 %v35
    %v170 = vunpack.c.l.b16 %v36
    %v171 = vunpack.c.l.b16 %v37
    %v172 = vunpack.c.l.b16 %v38
    %v173 = vunpack.c.l.b16 %v39
    %v174 = vunpack.c.l.b16 %v40
    %v175 = vunpack.c.l.b16 %v41
    %v176 = vunpack.c.l.b16 %v42
    %v177 = vunpack.c.l.b16 %v43
    %v178 = vunpack.c.l.b16 %v44
    %v179 = vunpack.c.l.b16 %v45
    %v180 = vunpack.c.l.b16 %v46
    %v181 = vunpack.c.l.b16 %v47
    %v182 = vpack.c.b16 %v167, %v166
    %v183 = vpack.c.b16 %v169, %v168
    %v184 = vpack.c.b16 %v171, %v170
    %v185 = vpack.c.b16 %v173, %v172
    %v186 = vpack.c.b16 %v175, %v174
    %v187 = vpack.c.b16 %v177, %v176
    %v188 = vpack.c.b16 %v179, %v178
    %v189 = vpack.c.b16 %v181, %v180
    %vm190 = vcmask 261120
    %v192 = vsel %vm190, %v144, 0
    %v195 = vsel %vm190, %v145, 0
    %v198 = vsel %vm190, %v146, 0
    %v201 = vsel %vm190, %v147, 0
    %v204 = vsel %vm190, %v148, 0
    %v207 = vsel %vm190, %v149, 0
    %v210 = vsel %vm190, %v182, 0
    %v213 = vsel %vm190, %v183, 0
    %v216 = vsel %vm190, %v184, 0
    %v219 = vsel %vm190, %v185, 0
    %v222 = vsel %vm190, %v186, 0
    %v225 = vsel %vm190, %v187, 0
    %v228 = vsel %vm190, %v188, 0
    %v231 = vsel %vm190, %v189, 0
    %233 = vmatprep.subr.bf16.mxu0 0
    %234 = vmatpush1.bf16.xpose.msra.mxu0 %v210
    %235 = vmatprep.subr.bf16.mxu0 0
    %236 = vmatpush1.bf16.xpose.msra.mxu0 %v213
    %237 = vmatprep.subr.bf16.mxu0 0
    %238 = vmatpush1.bf16.xpose.msra.mxu0 %v216
    %239 = vmatprep.subr.bf16.mxu0 0
    %240 = vmatpush1.bf16.xpose.msra.mxu0 %v219
    %241 = vmatprep.subr.bf16.mxu0 0
    %242 = vmatpush1.bf16.xpose.msra.mxu0 %v222
    %243 = vmatprep.subr.bf16.mxu0 0
    %244 = vmatpush1.bf16.xpose.msra.mxu0 %v225
    %245 = vmatprep.subr.bf16.mxu0 0
    %246 = vmatpush1.bf16.xpose.msra.mxu0 %v228
    %247 = vmatprep.subr.bf16.mxu0 0
    %248 = vmatpush1.bf16.xpose.msra.mxu0 %v231
    %249 = vmatprep.subr.bf16.mxu0 0
    %250 = vmatpush1.bf16.xpose.msra.mxu0 0
    %251 = vmatprep.subr.bf16.mxu0 0
    %252 = vmatpush1.bf16.xpose.msra.mxu0 0
    %253 = vmatprep.subr.bf16.mxu0 0
    %254 = vmatpush1.bf16.xpose.msra.mxu0 0
    %255 = vmatprep.subr.bf16.mxu0 0
    %256 = vmatpush1.bf16.xpose.msra.mxu0 0
    %257 = vmatprep.subr.bf16.mxu0 0
    %258 = vmatpush1.bf16.xpose.msra.mxu0 0
    %259 = vmatprep.subr.bf16.mxu0 0
    %260 = vmatpush1.bf16.xpose.msra.mxu0 0
    %261 = vmatprep.subr.bf16.mxu0 0
    %262 = vmatpush1.bf16.xpose.msra.mxu0 0
    %263 = vmatprep.subr.bf16.mxu0 0
    %264 = vmatpush1.bf16.xpose.msra.mxu0 0
    %265 = vmatprep.mubr.bf16.mxu0 0
    %266 = vmatmul.mubr.bf16.gmra.mrb[0].mxu0 %v192
    %v267 = vpop.f32.mrb[0].mxu0
    %v268 = vadd.f32 %v63, %v267
    %v269 = vpop.f32.mrb[0].mxu0
    %v270 = vpop.f32.mrb[0].mxu0
    %v271 = vadd.f32 %v68, %v270
    %v272 = vpop.f32.mrb[0].mxu0
    %273 = vmatprep.mubr.bf16.mxu0 0
    %274 = vmatmul.mubr.bf16.gmra.mrb[0].mxu0 %v195
    %v275 = vpop.f32.mrb[0].mxu0
    %v276 = vadd.f32 %v73, %v275
    %v277 = vpop.f32.mrb[0].mxu0
    %v278 = vpop.f32.mrb[0].mxu0
    %v279 = vadd.f32 %v78, %v278
    %v280 = vpop.f32.mrb[0].mxu0
    %281 = vmatprep.mubr.bf16.mxu0 0
    %282 = vmatmul.mubr.bf16.gmra.mrb[0].mxu0 %v198
    %v283 = vpop.f32.mrb[0].mxu0
    %v284 = vadd.f32 %v83, %v283
    %v285 = vpop.f32.mrb[0].mxu0
    %v286 = vpop.f32.mrb[0].mxu0
    %v287 = vadd.f32 %v88, %v286
    %v288 = vpop.f32.mrb[0].mxu0
    %289 = vmatprep.mubr.bf16.mxu0 0
    %290 = vmatmul.mubr.bf16.gmra.mrb[0].mxu0 %v201
    %v291 = vpop.f32.mrb[0].mxu0
    %v292 = vadd.f32 %v93, %v291
    %v293 = vpop.f32.mrb[0].mxu0
    %v294 = vpop.f32.mrb[0].mxu0
    %v295 = vadd.f32 %v98, %v294
    %v296 = vpop.f32.mrb[0].mxu0
    %297 = vmatprep.mubr.bf16.mxu0 0
    %298 = vmatmul.mubr.bf16.gmra.mrb[0].mxu0 %v204
    %v299 = vpop.f32.mrb[0].mxu0
    %v300 = vadd.f32 %v103, %v299
    %v301 = vpop.f32.mrb[0].mxu0
    %v302 = vpop.f32.mrb[0].mxu0
    %v303 = vadd.f32 %v108, %v302
    %v304 = vpop.f32.mrb[0].mxu0
    %305 = vmatprep.mubr.bf16.mxu0 0
    %306 = vmatmul.mubr.bf16.gmra.mrb[0].mxu0 %v207
    %v307 = vpop.f32.mrb[0].mxu0
    %v308 = vadd.f32 %v113, %v307
    %v309 = vpop.f32.mrb[0].mxu0
    %v310 = vpop.f32.mrb[0].mxu0
    %v311 = vadd.f32 %v118, %v310
    %v312 = vpop.f32.mrb[0].mxu0
    %313 = vdwg.mxu0
    %v314 = vpack.c.bf16 %v271, %v268
    %v315 = vpack.c.bf16 %v279, %v276
    %v316 = vpack.c.bf16 %v287, %v284
    %v317 = vpack.c.bf16 %v295, %v292
    %v318 = vpack.c.bf16 %v303, %v300
    %v319 = vpack.c.bf16 %v311, %v308
    %v322 = vunpack.c.l.b16 %v314
    %v323 = vunpack.c.h.b16 %v314
    %v324 = vunpack.c.l.b16 %v315
    %v325 = vunpack.c.h.b16 %v315
    %v326 = vpack.c.b16 %v322, %v322
    %v327 = vpack.c.b16 %v323, %v323
    %v328 = vpack.c.b16 %v324, %v324
    %v329 = vpack.c.b16 %v325, %v325
    %334 = vst [vmem:[#allocation2] sm:$0xf] %v326
    %335 = vst [vmem:[#allocation2 + $0x4] sm:$0xf] %v327
    %336 = vst [vmem:[#allocation2 + $0x8] sm:$0xf] %v328
    %337 = vst [vmem:[#allocation2 + $0xc] sm:$0xf] %v329
    %v340 = vunpack.c.l.b16 %v316
    %v341 = vunpack.c.h.b16 %v316
    %v342 = vunpack.c.l.b16 %v317
    %v343 = vunpack.c.h.b16 %v317
    %v344 = vpack.c.b16 %v340, %v340
    %v345 = vpack.c.b16 %v341, %v341
    %v346 = vpack.c.b16 %v342, %v342
    %v347 = vpack.c.b16 %v343, %v343
    %352 = vst [vmem:[#allocation4] sm:$0xf] %v344
    %353 = vst [vmem:[#allocation4 + $0x4] sm:$0xf] %v345
    %354 = vst [vmem:[#allocation4 + $0x8] sm:$0xf] %v346
    %355 = vst [vmem:[#allocation4 + $0xc] sm:$0xf] %v347
    %v358 = vunpack.c.l.b16 %v318
    %v359 = vunpack.c.h.b16 %v318
    %v360 = vunpack.c.l.b16 %v319
    %v361 = vunpack.c.h.b16 %v319
    %v362 = vpack.c.b16 %v358, %v358
    %v363 = vpack.c.b16 %v359, %v359
    %v364 = vpack.c.b16 %v360, %v360
    %v365 = vpack.c.b16 %v361, %v361
    %370 = vst [vmem:[#allocation6] sm:$0xf] %v362
    %371 = vst [vmem:[#allocation6 + $0x4] sm:$0xf] %v363
    %372 = vst [vmem:[#allocation6 + $0x8] sm:$0xf] %v364
    %373 = vst [vmem:[#allocation6 + $0xc] sm:$0xf] %v365
    // Predicated region
    $region14: #{tpu_custom_call.1} parent=1 // pred_check
      _
    $region15: #{tpu_custom_call.1} parent=1 // pred_check_branch
      %375 = sbr.rel (0) target = $region17
    $region16: #{tpu_custom_call.1} parent=1 // pred_region
      %s377 = ssub.s32 256, 256
      %378 = vsyncadd [#allocation3], %s377
      %s379 = sshll.u32 [#allocation2], 4
      %s380 = int_to_ptr.vmem [resolvable:$true] %s379
      %385 = dma.vmem_to_hbm [thread:$0]  %s380, 256, %s3, [#allocation3], 64, 64, 4
    $region17: #{tpu_custom_call.1} parent=1 // pred_fallthru
      _
    // Predicated region
    $region18: #{tpu_custom_call.1} parent=1 // pred_check
      _
    $region19: #{tpu_custom_call.1} parent=1 // pred_check_branch
      %387 = sbr.rel (0) target = $region21
    $region20: #{tpu_custom_call.1} parent=1 // pred_region
      %s389 = ssub.s32 256, 256
      %390 = vsyncadd [#allocation5], %s389
      %s391 = sshll.u32 [#allocation4], 4
      %s392 = int_to_ptr.vmem [resolvable:$true] %s391
      %397 = dma.vmem_to_hbm [thread:$0]  %s392, 256, %s4, [#allocation5], 64, 64, 4
    $region21: #{tpu_custom_call.1} parent=1 // pred_fallthru
      _
    // Predicated region
    $region22: #{tpu_custom_call.1} parent=1 // pred_check
      _
    $region23: #{tpu_custom_call.1} parent=1 // pred_check_branch
      %399 = sbr.rel (0) target = $region25
    $region24: #{tpu_custom_call.1} parent=1 // pred_region
      %s401 = ssub.s32 256, 256
      %402 = vsyncadd [#allocation5], %s401
      %s403 = sshll.u32 [#allocation6], 4
      %s404 = int_to_ptr.vmem [resolvable:$true] %s403
      %409 = dma.vmem_to_hbm [thread:$0]  %s404, 256, %s5, [#allocation5], 64, 64, 4
    $region25: #{tpu_custom_call.1} parent=1 // pred_fallthru
      _
    // Predicated region
    $region26: #{tpu_custom_call.1} parent=1 // pred_check
      _
    $region27: #{tpu_custom_call.1} parent=1 // pred_check_branch
      %411 = sbr.rel (0) target = $region29
    $region28: #{tpu_custom_call.1} parent=1 // pred_region
      %412 = dma.done [#allocation3], 256
    $region29: #{tpu_custom_call.1} parent=1 // pred_fallthru
      _
    // Predicated region
    $region30: #{tpu_custom_call.1} parent=1 // pred_check
      _
    $region31: #{tpu_custom_call.1} parent=1 // pred_check_branch
      %414 = sbr.rel (0) target = $region33
    $region32: #{tpu_custom_call.1} parent=1 // pred_region
      %415 = dma.done [#allocation5], 256
    $region33: #{tpu_custom_call.1} parent=1 // pred_fallthru
      _
    // Predicated region
    $region34: #{tpu_custom_call.1} parent=1 // pred_check
      _
    $region35: #{tpu_custom_call.1} parent=1 // pred_check_branch
      %417 = sbr.rel (0) target = $region37
    $region36: #{tpu_custom_call.1} parent=1 // pred_region
      %418 = dma.done [#allocation5], 256
    $region37: #{tpu_custom_call.1} parent=1 // pred_fallthru
      _
    %419 = vsyncpa [#allocation3], 1
    %420 = vsyncpa [#allocation5], 1

</llo_original>
